<compile_context>
chip_gen: v5e
topology: v5e:2x2
jax: 0.10.0
libtpu: 0.0.40
codegen_flags: <defaults>
</compile_context>

<pallas_src>
import jax
import jax.numpy as jnp
from jax.experimental import pallas as pl
from jax.experimental.pallas import tpu as pltpu


def _output_layer_kernel(x_ref, w1_ref, b1_ref, w2_ref, b2_ref, o_ref):
    # x_ref : (K, tile)          f32  -- lane-dense transposed input block
    # w1_ref: (hidden, K)        f32  -- FC1 weight, native PyTorch layout
    # b1_ref: (hidden, 1)        f32
    # w2_ref: (horizon, hidden)  f32  -- FC2 weight, native PyTorch layout
    # b2_ref: (horizon, 1)       f32
    # o_ref : (horizon, tile)    f32  -- lane-dense output block
    # FC1: single MXU contraction over K = history*in_dim, then bias + ReLU.
    hT = jnp.dot(w1_ref[...], x_ref[...], preferred_element_type=jnp.float32)
    hT = jnp.maximum(hT + b1_ref[...], 0.0)
    # FC2: plain (horizon, hidden) @ (hidden, tile) -- standard MXU operands.
    out = jnp.dot(w2_ref[...], hT, preferred_element_type=jnp.float32)
    o_ref[...] = (out + b2_ref[...]).astype(o_ref.dtype)


def _vmem_limit_bytes(K, tile, hidden, horizon):
    # Double-buffered x / out blocks + resident weights/biases + the
    # (hidden, tile) intermediate; ~2x headroom, clamped to a sane range.
    words = (2 * (K + horizon) * tile
             + hidden * (K + 1) + horizon * (hidden + 1)
             + 3 * hidden * tile)
    return int(min(96 * 1024 * 1024, max(4 * 1024 * 1024, 8 * words)))


def output_layer_forward(x, w1, b1, w2, b2, *, num_of_vertices, history, in_dim,
                         hidden_dim, horizon, tile_n=None):
    """
    x:  (B, Tin=history, N=num_of_vertices, Cin=in_dim)  float32
    w1: (hidden_dim, in_dim*history)   (PyTorch nn.Linear weight layout)
    b1: (hidden_dim,)
    w2: (horizon, hidden_dim)
    b2: (horizon,)
    returns: (B, horizon, N) float32   (== PyTorch module forward)
    """
    B = x.shape[0]
    N = num_of_vertices
    K = in_dim * history

    w1_f = w1.astype(jnp.float32)
    w2_f = w2.astype(jnp.float32)
    b1_2d = b1.reshape(hidden_dim, 1).astype(jnp.float32)
    b2_2d = b2.reshape(horizon, 1).astype(jnp.float32)

    flops = 2 * B * N * (K * hidden_dim + hidden_dim * horizon)
    bytes_accessed = 4 * (x.size + w1.size + b1.size + w2.size + b2.size
                          + B * horizon * N)

    if N < 128:
        # Small-graph path: fold batch onto the lane axis -> wide stores and
        # B x more work per grid step.
        M = B * N
        tile = tile_n if tile_n is not None else (
            min(2048, (M // 128) * 128) if M >= 128 else M)
        n_tiles = pl.cdiv(M, tile)
        # (B,Tin,N,Cin) -> (Tin,Cin,B,N) -> (K, B*N); feature index t*Cin + c
        # matches PyTorch's x.permute(0,2,1,3).reshape(B, N, -1) flattening.
        xT = jnp.transpose(x, (1, 3, 0, 2)).reshape(K, M).astype(jnp.float32)

        out = pl.pallas_call(
            _output_layer_kernel,
            out_shape=jax.ShapeDtypeStruct((horizon, M), jnp.float32),
            grid_spec=pltpu.PrefetchScalarGridSpec(
                num_scalar_prefetch=0,
                grid=(n_tiles,),
                in_specs=[
                    pl.BlockSpec((K, tile), lambda n: (0, n)),
                    pl.BlockSpec((hidden_dim, K), lambda n: (0, 0)),
                    pl.BlockSpec((hidden_dim, 1), lambda n: (0, 0)),
                    pl.BlockSpec((horizon, hidden_dim), lambda n: (0, 0)),
                    pl.BlockSpec((horizon, 1), lambda n: (0, 0)),
                ],
                out_specs=pl.BlockSpec((horizon, tile), lambda n: (0, n)),
            ),
            compiler_params=pltpu.CompilerParams(
                dimension_semantics=("parallel",),
                vmem_limit_bytes=_vmem_limit_bytes(K, tile, hidden_dim, horizon)),
            cost_estimate=pl.CostEstimate(flops=flops, transcendentals=0,
                                          bytes_accessed=bytes_accessed),
        )(xT, w1_f, b1_2d, w2_f, b2_2d)
        # (horizon, B*N) -> (B, horizon, N)
        return jnp.transpose(out.reshape(horizon, B, N), (1, 0, 2))

    # Large-graph path: grid over (batch, vertex tiles); output is written
    # directly in (B, horizon, N) layout (lane-dense, no post-transpose).
    tile = tile_n if tile_n is not None else min(2048, (N // 128) * 128)
    n_tiles = pl.cdiv(N, tile)
    # (B,Tin,N,Cin) -> (B,Tin,Cin,N) -> (B, K, N); same feature ordering.
    xT = jnp.transpose(x, (0, 1, 3, 2)).reshape(B, K, N).astype(jnp.float32)

    out = pl.pallas_call(
        _output_layer_kernel,
        out_shape=jax.ShapeDtypeStruct((B, horizon, N), jnp.float32),
        grid_spec=pltpu.PrefetchScalarGridSpec(
            num_scalar_prefetch=0,
            grid=(B, n_tiles),
            in_specs=[
                pl.BlockSpec((None, K, tile), lambda b, n: (b, 0, n)),
                pl.BlockSpec((hidden_dim, K), lambda b, n: (0, 0)),
                pl.BlockSpec((hidden_dim, 1), lambda b, n: (0, 0)),
                pl.BlockSpec((horizon, hidden_dim), lambda b, n: (0, 0)),
                pl.BlockSpec((horizon, 1), lambda b, n: (0, 0)),
            ],
            out_specs=pl.BlockSpec((None, horizon, tile), lambda b, n: (b, 0, n)),
        ),
        compiler_params=pltpu.CompilerParams(
            dimension_semantics=("parallel", "parallel"),
            vmem_limit_bytes=_vmem_limit_bytes(K, tile, hidden_dim, horizon)),
        cost_estimate=pl.CostEstimate(flops=flops, transcendentals=0,
                                      bytes_accessed=bytes_accessed),
    )(xT, w1_f, b1_2d, w2_f, b2_2d)
    return out


def reference_forward(x, w1, b1, w2, b2, *, num_of_vertices, history, in_dim,
                      hidden_dim, horizon):
    # Pure-JAX f32 reference, exactly mirroring the PyTorch module forward.
    B = x.shape[0]
    xf = jnp.transpose(x, (0, 2, 1, 3)).reshape(B, num_of_vertices, -1)
    h = jax.nn.relu(
        jnp.einsum('bnk,hk->bnh', xf, w1,
                   precision=jax.lax.Precision.HIGHEST) + b1)
    o = jnp.einsum('bnh,jh->bnj', h, w2,
                   precision=jax.lax.Precision.HIGHEST) + b2
    return jnp.transpose(o, (0, 2, 1))


def _run_case(key, *, B, history, num_of_vertices, in_dim, hidden_dim, horizon):
    kx, kw1, kb1, kw2, kb2 = jax.random.split(key, 5)
    x = jax.random.normal(kx, (B, history, num_of_vertices, in_dim),
                          dtype=jnp.float32)
    fan_in1 = in_dim * history
    w1 = jax.random.uniform(kw1, (hidden_dim, fan_in1), jnp.float32,
                            -1.0 / jnp.sqrt(fan_in1), 1.0 / jnp.sqrt(fan_in1))
    b1 = jax.random.uniform(kb1, (hidden_dim,), jnp.float32,
                            -1.0 / jnp.sqrt(fan_in1), 1.0 / jnp.sqrt(fan_in1))
    w2 = jax.random.uniform(kw2, (horizon, hidden_dim), jnp.float32,
                            -1.0 / jnp.sqrt(hidden_dim), 1.0 / jnp.sqrt(hidden_dim))
    b2 = jax.random.uniform(kb2, (horizon,), jnp.float32,
                            -1.0 / jnp.sqrt(hidden_dim), 1.0 / jnp.sqrt(hidden_dim))

    out = output_layer_forward(
        x, w1, b1, w2, b2,
        num_of_vertices=num_of_vertices, history=history, in_dim=in_dim,
        hidden_dim=hidden_dim, horizon=horizon)
    out = jax.block_until_ready(out)

    ref = reference_forward(
        x, w1, b1, w2, b2,
        num_of_vertices=num_of_vertices, history=history, in_dim=in_dim,
        hidden_dim=hidden_dim, horizon=horizon)

    assert out.shape == (B, horizon, num_of_vertices), out.shape
    assert jnp.allclose(out, ref, atol=5e-3, rtol=5e-3), "mismatch vs reference"


if __name__ == "__main__":
    key = jax.random.PRNGKey(0)
    k_small, k_large = jax.random.split(key)

    # Small shapes consistent with the module's forward (exercises the
    # batch-folded small-N path): x is (B, Tin=history, N, Cin=in_dim).
    _run_case(k_small, B=2, history=8, num_of_vertices=16, in_dim=4,
              hidden_dim=32, horizon=12)

    # Larger graph (exercises the tiled (batch, vertex-tile) path).
    _run_case(k_large, B=2, history=8, num_of_vertices=256, in_dim=4,
              hidden_dim=64, horizon=12)

    print("KERNEL_OK")
</pallas_src>

<mosaic_0001>
module attributes {stable_mosaic.version = 11 : i64} {
  func.func @_output_layer_kernel(%arg0: i32, %arg1: memref<32x32xf32, #tpu.memory_space<vmem>>, %arg2: memref<32x32xf32, #tpu.memory_space<vmem>>, %arg3: memref<32x1xf32, #tpu.memory_space<vmem>>, %arg4: memref<12x32xf32, #tpu.memory_space<vmem>>, %arg5: memref<12x1xf32, #tpu.memory_space<vmem>>, %arg6: memref<12x32xf32, #tpu.memory_space<vmem>>) attributes {dimension_semantics = [#tpu.dimension_semantics<parallel>], iteration_bounds = array<i64: 1>, scalar_prefetch = 0 : i64, scratch_operands = 0 : i64, tpu.core_type = #tpu.core_type<tc>, window_params = [{transform_indices = @transform_0, window_bounds = array<i64: 32, 32>}, {pipeline_mode = #tpu.pipeline_mode<synchronous>, transform_indices = @transform_1, window_bounds = array<i64: 32, 32>}, {pipeline_mode = #tpu.pipeline_mode<synchronous>, transform_indices = @transform_2, window_bounds = array<i64: 32, 1>}, {pipeline_mode = #tpu.pipeline_mode<synchronous>, transform_indices = @transform_3, window_bounds = array<i64: 12, 32>}, {pipeline_mode = #tpu.pipeline_mode<synchronous>, transform_indices = @transform_4, window_bounds = array<i64: 12, 1>}, {transform_indices = @transform_5, window_bounds = array<i64: 12, 32>}]} {
    %c0 = arith.constant 0 : index
    %c0_0 = arith.constant 0 : index
    %0 = vector.load %arg2[%c0, %c0_0] : memref<32x32xf32, #tpu.memory_space<vmem>>, vector<32x32xf32>
    %c0_1 = arith.constant 0 : index
    %c0_2 = arith.constant 0 : index
    %1 = vector.load %arg1[%c0_1, %c0_2] : memref<32x32xf32, #tpu.memory_space<vmem>>, vector<32x32xf32>
    %cst = arith.constant dense<0.000000e+00> : vector<32x32xf32>
    %2 = tpu.matmul %0, %1, %cst {dimension_numbers = #tpu.dot_dimension_numbers<[1], [0], [0], [1], [0, 0, 1, 1], [], []>} : vector<32x32xf32>, vector<32x32xf32>, vector<32x32xf32> -> vector<32x32xf32>
    %c0_3 = arith.constant 0 : index
    %c0_4 = arith.constant 0 : index
    %3 = vector.load %arg3[%c0_3, %c0_4] : memref<32x1xf32, #tpu.memory_space<vmem>>, vector<32x1xf32>
    %4 = vector.broadcast %3 : vector<32x1xf32> to vector<32x32xf32>
    %5 = arith.addf %2, %4 : vector<32x32xf32>
    %cst_5 = arith.constant 0.000000e+00 : f32
    %6 = vector.broadcast %cst_5 : f32 to vector<32x32xf32>
    %7 = arith.maximumf %5, %6 : vector<32x32xf32>
    %c0_6 = arith.constant 0 : index
    %c0_7 = arith.constant 0 : index
    %8 = vector.load %arg4[%c0_6, %c0_7] : memref<12x32xf32, #tpu.memory_space<vmem>>, vector<12x32xf32>
    %cst_8 = arith.constant dense<0.000000e+00> : vector<12x32xf32>
    %9 = tpu.matmul %8, %7, %cst_8 {dimension_numbers = #tpu.dot_dimension_numbers<[1], [0], [0], [1], [0, 0, 1, 1], [], []>} : vector<12x32xf32>, vector<32x32xf32>, vector<12x32xf32> -> vector<12x32xf32>
    %c0_9 = arith.constant 0 : index
    %c0_10 = arith.constant 0 : index
    %10 = vector.load %arg5[%c0_9, %c0_10] : memref<12x1xf32, #tpu.memory_space<vmem>>, vector<12x1xf32>
    %11 = vector.broadcast %10 : vector<12x1xf32> to vector<12x32xf32>
    %12 = arith.addf %9, %11 : vector<12x32xf32>
    %c0_11 = arith.constant 0 : index
    %c0_12 = arith.constant 0 : index
    %13 = vector.load %arg6[%c0_11, %c0_12] : memref<12x32xf32, #tpu.memory_space<vmem>>, vector<12x32xf32>
    tpu.vector_store %arg6[%c0_11, %c0_12], %12 {strides = array<i32>} : memref<12x32xf32, #tpu.memory_space<vmem>>, vector<12x32xf32>,
    return
  }
  func.func @transform_0(%arg0: i32) -> (i32, i32) {
    %c0_i32 = arith.constant 0 : i32
    %c0_i32_0 = arith.constant 0 : i32
    return %c0_i32, %arg0 : i32, i32
  }
  func.func @transform_1(%arg0: i32) -> (i32, i32) {
    %c0_i32 = arith.constant 0 : i32
    %c0_i32_0 = arith.constant 0 : i32
    %c0_i32_1 = arith.constant 0 : i32
    return %c0_i32, %c0_i32_0 : i32, i32
  }
  func.func @transform_2(%arg0: i32) -> (i32, i32) {
    %c0_i32 = arith.constant 0 : i32
    %c0_i32_0 = arith.constant 0 : i32
    %c0_i32_1 = arith.constant 0 : i32
    return %c0_i32, %c0_i32_0 : i32, i32
  }
  func.func @transform_3(%arg0: i32) -> (i32, i32) {
    %c0_i32 = arith.constant 0 : i32
    %c0_i32_0 = arith.constant 0 : i32
    %c0_i32_1 = arith.constant 0 : i32
    return %c0_i32, %c0_i32_0 : i32, i32
  }
  func.func @transform_4(%arg0: i32) -> (i32, i32) {
    %c0_i32 = arith.constant 0 : i32
    %c0_i32_0 = arith.constant 0 : i32
    %c0_i32_1 = arith.constant 0 : i32
    return %c0_i32, %c0_i32_0 : i32, i32
  }
  func.func @transform_5(%arg0: i32) -> (i32, i32) {
    %c0_i32 = arith.constant 0 : i32
    %c0_i32_0 = arith.constant 0 : i32
    return %c0_i32, %arg0 : i32, i32
  }
}

</mosaic_0001>

<llo_original>
// kernel: tpu_custom_call.1
$region0: #{tpu_custom_call.1}
  #allocation0 [shape = 'u32[]', space=smem, size = 0x4, offset = 0x4, fixed_abs, tag = 'smem constant byte address 0x4 - core index']
  #allocation1 [shape = 'u32[72,128]{1,0:T(1,128)}', space=vmem, size = 0x9000, scoped, tag = 'internal scratch']
  %s0 = inlined_call_operand.vmem [shape: f32[32,32], index: 0, kind: input, shape index: {}]
  %s1 = inlined_call_operand.hbm [shape: f32[32,32], index: 1, kind: input, shape index: {}]
  %s2 = inlined_call_operand.vmem [shape: f32[32,1], index: 2, kind: input, shape index: {}]
  %s3 = inlined_call_operand.vmem [shape: f32[12,32], index: 3, kind: input, shape index: {}]
  %s4 = inlined_call_operand.vmem [shape: f32[12,1], index: 4, kind: input, shape index: {}]
  %s5 = inlined_call_operand.hbm [shape: f32[12,32], index: 5, kind: output, shape index: {}]
  %s6 = sld [smem:[#allocation0]]
  $region34: #{tpu_custom_call.1} parent=0
    _
  %s8 = ssub.s32 1, %s6
  %s9 = scalar_select 0, %s8, %s6
  $region1: #{tpu_custom_call.1} parent=0
    #allocation2 [shape = 'u8[16384]{0}', space=vmem, size = 0x4000, scoped, tag = 'input window, operand 1, single buffered']
    #allocation3 [shape = 's32[1]{0}', space=sflag, size = 0x4, scoped, tag = 'scoped memory for tpu_custom_call.1']
    #allocation4 [shape = 's32[1]{0}', space=sflag, size = 0x4, scoped, tag = 'scoped memory for tpu_custom_call.1']
    #allocation5 [shape = 'u8[8192]{0}', space=vmem, size = 0x2000, scoped, tag = 'output window, operand 0, single buffered']
    %10 = vsyncpa [#allocation3], 0
    %11 = vsyncpa [#allocation4], 0
    // Predicated region
    $region2: #{tpu_custom_call.1} parent=1 // pred_check
      _
    $region3: #{tpu_custom_call.1} parent=1 // pred_check_branch
      %13 = sbr.rel (0) target = $region5
    $region4: #{tpu_custom_call.1} parent=1 // pred_region
      _
    $region5: #{tpu_custom_call.1} parent=1 // pred_fallthru
      _
    // Predicated region
    $region6: #{tpu_custom_call.1} parent=1 // pred_check
      _
    $region7: #{tpu_custom_call.1} parent=1 // pred_check_branch
      %15 = sbr.rel (0) target = $region9
    $region8: #{tpu_custom_call.1} parent=1 // pred_region
      %17 = vsyncadd [#allocation3], 0
      %s18 = sshll.u32 %s1, 4
      %s19 = int_to_ptr.hbm [resolvable:$true] %s18
      %s20 = sshll.u32 [#allocation2], 4
      %s21 = int_to_ptr.vmem [resolvable:$true] %s20
      %26 = dma.hbm_to_vmem [thread:$0]  %s19, 512, %s21, [#allocation3], 128, 128, 8
    $region9: #{tpu_custom_call.1} parent=1 // pred_fallthru
      _
    // Predicated region
    $region10: #{tpu_custom_call.1} parent=1 // pred_check
      _
    $region11: #{tpu_custom_call.1} parent=1 // pred_check_branch
      %28 = sbr.rel (0) target = $region13
    $region12: #{tpu_custom_call.1} parent=1 // pred_region
      _
    $region13: #{tpu_custom_call.1} parent=1 // pred_fallthru
      _
    // Predicated region
    $region14: #{tpu_custom_call.1} parent=1 // pred_check
      _
    $region15: #{tpu_custom_call.1} parent=1 // pred_check_branch
      %30 = sbr.rel (0) target = $region17
    $region16: #{tpu_custom_call.1} parent=1 // pred_region
      _
    $region17: #{tpu_custom_call.1} parent=1 // pred_fallthru
      _
    // Predicated region
    $region18: #{tpu_custom_call.1} parent=1 // pred_check
      _
    $region19: #{tpu_custom_call.1} parent=1 // pred_check_branch
      %32 = sbr.rel (0) target = $region21
    $region20: #{tpu_custom_call.1} parent=1 // pred_region
      _
    $region21: #{tpu_custom_call.1} parent=1 // pred_fallthru
      _
    // Predicated region
    $region22: #{tpu_custom_call.1} parent=1 // pred_check
      _
    $region23: #{tpu_custom_call.1} parent=1 // pred_check_branch
      %34 = sbr.rel (0) target = $region25
    $region24: #{tpu_custom_call.1} parent=1 // pred_region
      %36 = dma.done [#allocation3], 512
    $region25: #{tpu_custom_call.1} parent=1 // pred_fallthru
      _
    %v37 = vld [vmem:[#allocation2] sm:$0xff]
    %v38 = vld [vmem:[#allocation2 + $0x8] sm:$0xff]
    %v39 = vld [vmem:[#allocation2 + $0x10] sm:$0xff]
    %v40 = vld [vmem:[#allocation2 + $0x18] sm:$0xff]
    %v41 = vld [vmem:[%s0] sm:$0xff]
    %v42 = vld [vmem:[%s0 + $0x8] sm:$0xff]
    %v43 = vld [vmem:[%s0 + $0x10] sm:$0xff]
    %v44 = vld [vmem:[%s0 + $0x18] sm:$0xff]
    %v45 = vld [vmem:[%s2] sm:$0xff]
    %v46 = vld [vmem:[%s2 + $0x8] sm:$0xff]
    %v47 = vld [vmem:[%s2 + $0x10] sm:$0xff]
    %v48 = vld [vmem:[%s2 + $0x18] sm:$0xff]
    %50 = vset.pattern.permute.xlu0 0
    %51 = vperm.xlu0 %50, %v45
    %v52 = vpop.permute.xlu0 %51
    %55 = vset.pattern.permute.xlu0 0
    %56 = vperm.xlu0 %55, %v46
    %v57 = vpop.permute.xlu0 %56
    %60 = vset.pattern.permute.xlu0 0
    %61 = vperm.xlu0 %60, %v47
    %v62 = vpop.permute.xlu0 %61
    %65 = vset.pattern.permute.xlu0 0
    %66 = vperm.xlu0 %65, %v48
    %v67 = vpop.permute.xlu0 %66
    %vm69 = vcmask 261120
    %v71 = vsel %vm69, %v37, 0
    %v74 = vsel %vm69, %v38, 0
    %v77 = vsel %vm69, %v39, 0
    %v80 = vsel %vm69, %v40, 0
    %82 = vmatpush.msra.mxu0 0.0
    %83 = vmatpush.msra.mxu0 0.0
    %84 = vmatpush.msra.mxu0 0.0
    %85 = vmatpush.msra.mxu0 0.0
    %86 = vmatpush.msra.mxu0 0.0
    %87 = vmatpush.msra.mxu0 0.0
    %88 = vmatpush.msra.mxu0 0.0
    %89 = vmatpush.msra.mxu0 0.0
    %90 = vmatpush.msra.mxu0 0.0
    %91 = vmatpush.msra.mxu0 0.0
    %92 = vmatpush.msra.mxu0 0.0
    %93 = vmatpush.msra.mxu0 0.0
    %94 = vmatpush.msra.mxu0 %v44
    %95 = vmatpush.msra.mxu0 %v43
    %96 = vmatpush.msra.mxu0 %v42
    %97 = vmatpush.msra.mxu0 %v41
    %98 = vmatmul.f32.gmra.mxu0 %v71
    %v99 = vpop.f32.mrf.mxu0
    %v100 = vadd.f32 %v52, %v99
    %101 = vmatmul.f32.gmra.mxu0 %v74
    %v102 = vpop.f32.mrf.mxu0
    %v103 = vadd.f32 %v57, %v102
    %104 = vmatmul.f32.gmra.mxu0 %v77
    %v105 = vpop.f32.mrf.mxu0
    %v106 = vadd.f32 %v62, %v105
    %107 = vmatmul.f32.gmra.mxu0 %v80
    %v108 = vpop.f32.mrf.mxu0
    %v109 = vadd.f32 %v67, %v108
    %110 = vdwg.mxu0
    %v111 = vmax.f32 %v100, 0.0
    %v112 = vmax.f32 %v103, 0.0
    %v113 = vmax.f32 %v106, 0.0
    %v114 = vmax.f32 %v109, 0.0
    %v115 = vld [vmem:[%s3] sm:$0xff]
    %v116 = vld [vmem:[%s3 + $0x8] sm:$0xf]
    %v117 = vld [vmem:[%s4] sm:$0xff]
    %v118 = vld [vmem:[%s4 + $0x8] sm:$0xf]
    %120 = vset.pattern.permute.xlu0 0
    %121 = vperm.xlu0 %120, %v117
    %v122 = vpop.permute.xlu0 %121
    %125 = vset.pattern.permute.xlu0 0
    %126 = vperm.xlu0 %125, %v118
    %v127 = vpop.permute.xlu0 %126
    %v130 = vsel %vm69, %v115, 0
    %v133 = vsel %vm69, %v116, 0
    %135 = vmatpush.msra.mxu0 0.0
    %136 = vmatpush.msra.mxu0 0.0
    %137 = vmatpush.msra.mxu0 0.0
    %138 = vmatpush.msra.mxu0 0.0
    %139 = vmatpush.msra.mxu0 0.0
    %140 = vmatpush.msra.mxu0 0.0
    %141 = vmatpush.msra.mxu0 0.0
    %142 = vmatpush.msra.mxu0 0.0
    %143 = vmatpush.msra.mxu0 0.0
    %144 = vmatpush.msra.mxu0 0.0
    %145 = vmatpush.msra.mxu0 0.0
    %146 = vmatpush.msra.mxu0 0.0
    %147 = vmatpush.msra.mxu0 %v114
    %148 = vmatpush.msra.mxu0 %v113
    %149 = vmatpush.msra.mxu0 %v112
    %150 = vmatpush.msra.mxu0 %v111
    %151 = vmatmul.f32.gmra.mxu0 %v130
    %v152 = vpop.f32.mrf.mxu0
    %v153 = vadd.f32 %v122, %v152
    %154 = vmatmul.f32.gmra.mxu0 %v133
    %v155 = vpop.f32.mrf.mxu0
    %v156 = vadd.f32 %v127, %v155
    %157 = vdwg.mxu0
    %158 = vst.msk [vmem:[#allocation5] sm:$0xff] %vm69, %v153
    %vm159 = vcmask 257024
    %160 = vst.msk [vmem:[#allocation5 + $0x8] sm:$0xf] %vm159, %v156
    // Predicated region
    $region26: #{tpu_custom_call.1} parent=1 // pred_check
      _
    $region27: #{tpu_custom_call.1} parent=1 // pred_check_branch
      %162 = sbr.rel (0) target = $region29
    $region28: #{tpu_custom_call.1} parent=1 // pred_region
      %164 = vsyncadd [#allocation4], 0
      %s165 = sshll.u32 [#allocation5], 4
      %s166 = int_to_ptr.vmem [resolvable:$true] %s165
      %s167 = sshll.u32 %s5, 4
      %s168 = int_to_ptr.hbm [resolvable:$true] %s167
      %173 = dma.vmem_to_hbm [thread:$0]  %s166, 256, %s168, [#allocation4], 128, 128, 8
    $region29: #{tpu_custom_call.1} parent=1 // pred_fallthru
      _
    // Predicated region
    $region30: #{tpu_custom_call.1} parent=1 // pred_check
      _
    $region31: #{tpu_custom_call.1} parent=1 // pred_check_branch
      %175 = sbr.rel (0) target = $region33
    $region32: #{tpu_custom_call.1} parent=1 // pred_region
      %177 = dma.done [#allocation4], 256
    $region33: #{tpu_custom_call.1} parent=1 // pred_fallthru
      _
    %178 = vsyncpa [#allocation3], 1
    %179 = vsyncpa [#allocation4], 1

</llo_original>
